<compile_context>
chip_gen: v7x
topology: tpu7x:2x2x1
jax: 0.10.0
libtpu: 0.0.40
codegen_flags: <defaults>
</compile_context>

<pallas_src>
import jax
import jax.numpy as jnp
from jax.experimental import pallas as pl
from jax.experimental.pallas import tpu as pltpu

_LANE = 128


def _choose_tiles(batch, max_batch_tile):
    """Pick a lane-aligned batch tile TB, padded batch Bp and grid step count."""
    lanes = pl.cdiv(batch, _LANE)                       # 128-wide lane groups needed
    cap_lanes = max(1, max_batch_tile // _LANE)
    n_steps = pl.cdiv(lanes, cap_lanes)
    # Keep >= 2 grid steps when there is enough work: the batch axis is marked
    # "parallel", so v7x's two TensorCores each take half. Costs ~0.35us extra on
    # single-TC v5e/v6e, which is negligible.
    if n_steps < 2 and lanes >= 2:
        n_steps = 2
    tb_lanes = pl.cdiv(lanes, n_steps)
    TB = tb_lanes * _LANE
    Bp = TB * n_steps
    return TB, Bp, n_steps


def _bnn_kernel(x_ref, w1_ref, b1_ref, wh_ref, bh_ref, out_ref):
    # fc1 on the MXU, lane-dense: h = relu(W1 @ x + b1)   (H, TB)
    h = jnp.dot(w1_ref[...], x_ref[...], preferred_element_type=jnp.float32)
    h = jnp.maximum(h + b1_ref[...], 0.0)                       # b1 (H,1) broadcasts over lanes

    # Fused heads, also lane-dense on the MXU: z = W_heads @ h  (2, TB)
    z = jnp.dot(wh_ref[...], h, preferred_element_type=jnp.float32)
    mu = z[0:1, :] + bh_ref[0]                                  # (1, TB)
    sigma = jnp.logaddexp(z[1:2, :] + bh_ref[1], 0.0) + 1e-6    # softplus, stays > 0

    # Single fused full-lane store: row 0 = mu, row 1 = sigma.
    out_ref[...] = jnp.concatenate([mu, sigma], axis=0).astype(out_ref.dtype)


def simple_bnn_forward(x, packed, *, max_batch_tile=8192, compute_dtype=jnp.float32):
    """Full forward pass in one Pallas kernel.

    x:      (B, input_dim) float32
    packed: dict from pack_params(): w1_t (H,D), b1_t (H,1), w_heads (2,H), b_heads (2,)
    compute_dtype: dtype for the fc1 matmul inputs (f32 default; bf16 halves x HBM traffic).
    returns (mu, sigma), each (B, 1) float32
    """
    B, D = x.shape
    w1_t, b1_t = packed["w1_t"], packed["b1_t"]
    w_heads, b_heads = packed["w_heads"], packed["b_heads"]
    H = w1_t.shape[0]

    TB, Bp, n_steps = _choose_tiles(B, max_batch_tile)

    # Lane-dense layout: one transposed (+ padded + cast) copy of x. This is layout
    # plumbing, not an extra HBM round-trip in front of the kernel's own x read.
    x_t = jnp.pad(x.astype(compute_dtype).T, ((0, 0), (0, Bp - B)))
    w1c = w1_t.astype(compute_dtype)

    out = pl.pallas_call(
        _bnn_kernel,
        out_shape=jax.ShapeDtypeStruct((2, Bp), jnp.float32),
        grid=(n_steps,),
        in_specs=[
            pl.BlockSpec((D, TB), lambda i: (0, i)),             # x: tiled over batch (lanes)
            pl.BlockSpec((H, D), lambda i: (0, 0)),              # w1 (resident)
            pl.BlockSpec((H, 1), lambda i: (0, 0)),              # b1 (resident)
            pl.BlockSpec((2, H), lambda i: (0, 0)),              # fused head weights
            pl.BlockSpec(memory_space=pltpu.MemorySpace.SMEM),   # fused head bias (2,)
        ],
        out_specs=pl.BlockSpec((2, TB), lambda i: (0, i)),
        compiler_params=pltpu.CompilerParams(
            dimension_semantics=("parallel",),
            vmem_limit_bytes=32 << 20,                           # headroom for big tiles; safe on v5e/v6e/v7x
        ),
    )(x_t, w1c, b1_t, w_heads, b_heads)

    mu = out[0, :B][:, None]
    sigma = out[1, :B][:, None]
    return mu, sigma


def init_params(key, input_dim=16, hidden_dim=64):
    """Deterministic parameter init (PyTorch-Linear-like uniform fan-in scaling)."""
    k1, k2, k3, k4, k5, k6 = jax.random.split(key, 6)

    def uniform(k, shape, fan_in):
        bound = 1.0 / jnp.sqrt(fan_in)
        return jax.random.uniform(k, shape, jnp.float32, -bound, bound)

    # Stored (in, out) for the reference x @ W; pack_params transposes for the kernel.
    return {
        "w1":      uniform(k1, (input_dim, hidden_dim), input_dim),
        "b1":      uniform(k2, (1, hidden_dim), input_dim),
        "w_mu":    uniform(k3, (hidden_dim, 1), hidden_dim),
        "b_mu":    uniform(k4, (1, 1), hidden_dim),
        "w_sigma": uniform(k5, (hidden_dim, 1), hidden_dim),
        "b_sigma": uniform(k6, (1, 1), hidden_dim),
    }


def pack_params(p):
    """One-time parameter setup: transpose to lane-dense layout and fuse the two heads."""
    return {
        "w1_t":    p["w1"].T,                                     # (H, D)
        "b1_t":    p["b1"].T,                                     # (H, 1)
        "w_heads": jnp.concatenate([p["w_mu"].T, p["w_sigma"].T], axis=0),              # (2, H)
        "b_heads": jnp.concatenate([p["b_mu"].reshape(1), p["b_sigma"].reshape(1)]),    # (2,)
    }


def _reference_forward(x, p):
    h = jax.nn.relu(x @ p["w1"] + p["b1"])
    mu = h @ p["w_mu"] + p["b_mu"]
    sigma = jax.nn.softplus(h @ p["w_sigma"] + p["b_sigma"]) + 1e-6
    return mu, sigma


if __name__ == "__main__":
    key = jax.random.PRNGKey(0)
    kx, kp = jax.random.split(key)

    B, input_dim, hidden_dim = 8, 16, 64
    x = jax.random.normal(kx, (B, input_dim), jnp.float32)
    params = init_params(kp, input_dim=input_dim, hidden_dim=hidden_dim)
    packed = pack_params(params)

    mu, sigma = simple_bnn_forward(x, packed)
    jax.block_until_ready((mu, sigma))

    mu_ref, sigma_ref = _reference_forward(x, params)
    assert mu.shape == (B, 1) and sigma.shape == (B, 1)
    assert jnp.allclose(mu, mu_ref, atol=1e-4, rtol=1e-4)
    assert jnp.allclose(sigma, sigma_ref, atol=1e-4, rtol=1e-4)
    assert bool(jnp.all(sigma > 0))

    # Ragged batch + multi-step grid (exercises lane padding and the >=2-step path).
    B2 = 300
    x2 = jax.random.normal(jax.random.PRNGKey(1), (B2, input_dim), jnp.float32)
    mu2, sigma2 = simple_bnn_forward(x2, packed, max_batch_tile=256)
    jax.block_until_ready((mu2, sigma2))
    mu2_ref, sigma2_ref = _reference_forward(x2, params)
    assert mu2.shape == (B2, 1) and sigma2.shape == (B2, 1)
    assert jnp.allclose(mu2, mu2_ref, atol=1e-4, rtol=1e-4)
    assert jnp.allclose(sigma2, sigma2_ref, atol=1e-4, rtol=1e-4)

    # bf16 fc1-input path (halves x HBM traffic at large B); looser tolerance.
    mu3, sigma3 = simple_bnn_forward(x2, packed, compute_dtype=jnp.bfloat16)
    jax.block_until_ready((mu3, sigma3))
    assert jnp.allclose(mu3, mu2_ref, atol=5e-2, rtol=5e-2)
    assert jnp.allclose(sigma3, sigma2_ref, atol=5e-2, rtol=5e-2)
    assert bool(jnp.all(sigma3 > 0))

    print("KERNEL_OK")
</pallas_src>

<mosaic_0001>
module attributes {stable_mosaic.version = 11 : i64} {
  func.func @_bnn_kernel(%arg0: i32, %arg1: memref<16x128xf32, #tpu.memory_space<vmem>>, %arg2: memref<64x16xf32, #tpu.memory_space<vmem>>, %arg3: memref<64x1xf32, #tpu.memory_space<vmem>>, %arg4: memref<2x64xf32, #tpu.memory_space<vmem>>, %arg5: memref<2xf32, #tpu.memory_space<smem>>, %arg6: memref<2x128xf32, #tpu.memory_space<vmem>>) attributes {dimension_semantics = [#tpu.dimension_semantics<parallel>], iteration_bounds = array<i64: 1>, scalar_prefetch = 0 : i64, scratch_operands = 0 : i64, tpu.core_type = #tpu.core_type<tc>, window_params = [{transform_indices = @transform_0, window_bounds = array<i64: 16, 128>}, {pipeline_mode = #tpu.pipeline_mode<synchronous>, transform_indices = @transform_1, window_bounds = array<i64: 64, 16>}, {pipeline_mode = #tpu.pipeline_mode<synchronous>, transform_indices = @transform_2, window_bounds = array<i64: 64, 1>}, {pipeline_mode = #tpu.pipeline_mode<synchronous>, transform_indices = @transform_3, window_bounds = array<i64: 2, 64>}, {transform_indices = @transform_4, window_bounds = array<i64: 2>}, {transform_indices = @transform_5, window_bounds = array<i64: 2, 128>}]} {
    %c0 = arith.constant 0 : index
    %c0_0 = arith.constant 0 : index
    %0 = vector.load %arg2[%c0, %c0_0] : memref<64x16xf32, #tpu.memory_space<vmem>>, vector<64x16xf32>
    %c0_1 = arith.constant 0 : index
    %c0_2 = arith.constant 0 : index
    %1 = vector.load %arg1[%c0_1, %c0_2] : memref<16x128xf32, #tpu.memory_space<vmem>>, vector<16x128xf32>
    %cst = arith.constant dense<0.000000e+00> : vector<64x128xf32>
    %2 = tpu.matmul %0, %1, %cst {dimension_numbers = #tpu.dot_dimension_numbers<[1], [0], [0], [1], [0, 0, 1, 1], [], []>} : vector<64x16xf32>, vector<16x128xf32>, vector<64x128xf32> -> vector<64x128xf32>
    %c0_3 = arith.constant 0 : index
    %c0_4 = arith.constant 0 : index
    %3 = vector.load %arg3[%c0_3, %c0_4] : memref<64x1xf32, #tpu.memory_space<vmem>>, vector<64x1xf32>
    %4 = vector.broadcast %3 : vector<64x1xf32> to vector<64x128xf32>
    %5 = arith.addf %2, %4 : vector<64x128xf32>
    %cst_5 = arith.constant 0.000000e+00 : f32
    %6 = vector.broadcast %cst_5 : f32 to vector<64x128xf32>
    %7 = arith.maximumf %5, %6 : vector<64x128xf32>
    %c0_6 = arith.constant 0 : index
    %c0_7 = arith.constant 0 : index
    %8 = vector.load %arg4[%c0_6, %c0_7] : memref<2x64xf32, #tpu.memory_space<vmem>>, vector<2x64xf32>
    %cst_8 = arith.constant dense<0.000000e+00> : vector<2x128xf32>
    %9 = tpu.matmul %8, %7, %cst_8 {dimension_numbers = #tpu.dot_dimension_numbers<[1], [0], [0], [1], [0, 0, 1, 1], [], []>} : vector<2x64xf32>, vector<64x128xf32>, vector<2x128xf32> -> vector<2x128xf32>
    %10 = vector.extract_strided_slice %9 {offsets = [0, 0], sizes = [1, 128], strides = [1, 1]} : vector<2x128xf32> to vector<1x128xf32>
    %c0_9 = arith.constant 0 : index
    %11 = memref.load %arg5[%c0_9] : memref<2xf32, #tpu.memory_space<smem>>
    %12 = vector.broadcast %11 : f32 to vector<1x128xf32>
    %13 = arith.addf %10, %12 : vector<1x128xf32>
    %14 = vector.extract_strided_slice %9 {offsets = [1, 0], sizes = [1, 128], strides = [1, 1]} : vector<2x128xf32> to vector<1x128xf32>
    %c1 = arith.constant 1 : index
    %15 = memref.load %arg5[%c1] : memref<2xf32, #tpu.memory_space<smem>>
    %16 = vector.broadcast %15 : f32 to vector<1x128xf32>
    %17 = arith.addf %14, %16 : vector<1x128xf32>
    %cst_10 = arith.constant 0.000000e+00 : f32
    %18 = vector.broadcast %cst_10 : f32 to vector<1x128xf32>
    %19 = arith.maximumf %17, %18 : vector<1x128xf32>
    %20 = vector.broadcast %cst_10 : f32 to vector<1x128xf32>
    %21 = arith.subf %17, %20 : vector<1x128xf32>
    %22 = arith.cmpf one, %21, %21 : vector<1x128xf32>
    %23 = vector.broadcast %cst_10 : f32 to vector<1x128xf32>
    %24 = arith.addf %17, %23 : vector<1x128xf32>
    %25 = math.absf %21 : vector<1x128xf32>
    %cst_11 = arith.constant 0.000000e+00 : f32
    %26 = vector.broadcast %cst_11 : f32 to vector<1x128xf32>
    %27 = arith.subf %26, %25 : vector<1x128xf32>
    %28 = math.exp %27 : vector<1x128xf32>
    %29 = math.log1p %28 : vector<1x128xf32>
    %30 = arith.addf %19, %29 : vector<1x128xf32>
    %31 = arith.select %22, %24, %30 : vector<1x128xi1>, vector<1x128xf32>
    %cst_12 = arith.constant 9.99999997E-7 : f32
    %32 = vector.broadcast %cst_12 : f32 to vector<1x128xf32>
    %33 = arith.addf %31, %32 : vector<1x128xf32>
    %34 = tpu.concatenate %13, %33 in 0 : vector<1x128xf32>, vector<1x128xf32> -> vector<2x128xf32>
    %c0_13 = arith.constant 0 : index
    %c0_14 = arith.constant 0 : index
    %35 = vector.load %arg6[%c0_13, %c0_14] : memref<2x128xf32, #tpu.memory_space<vmem>>, vector<2x128xf32>
    tpu.vector_store %arg6[%c0_13, %c0_14], %34 {strides = array<i32>} : memref<2x128xf32, #tpu.memory_space<vmem>>, vector<2x128xf32>,
    return
  }
  func.func @transform_0(%arg0: i32) -> (i32, i32) {
    %c0_i32 = arith.constant 0 : i32
    %c0_i32_0 = arith.constant 0 : i32
    return %c0_i32, %arg0 : i32, i32
  }
  func.func @transform_1(%arg0: i32) -> (i32, i32) {
    %c0_i32 = arith.constant 0 : i32
    %c0_i32_0 = arith.constant 0 : i32
    %c0_i32_1 = arith.constant 0 : i32
    return %c0_i32, %c0_i32_0 : i32, i32
  }
  func.func @transform_2(%arg0: i32) -> (i32, i32) {
    %c0_i32 = arith.constant 0 : i32
    %c0_i32_0 = arith.constant 0 : i32
    %c0_i32_1 = arith.constant 0 : i32
    return %c0_i32, %c0_i32_0 : i32, i32
  }
  func.func @transform_3(%arg0: i32) -> (i32, i32) {
    %c0_i32 = arith.constant 0 : i32
    %c0_i32_0 = arith.constant 0 : i32
    %c0_i32_1 = arith.constant 0 : i32
    return %c0_i32, %c0_i32_0 : i32, i32
  }
  func.func @transform_4(%arg0: i32) -> i32 {
    %c0_i32 = arith.constant 0 : i32
    %c0_i32_0 = arith.constant 0 : i32
    return %c0_i32 : i32
  }
  func.func @transform_5(%arg0: i32) -> (i32, i32) {
    %c0_i32 = arith.constant 0 : i32
    %c0_i32_0 = arith.constant 0 : i32
    return %c0_i32, %arg0 : i32, i32
  }
}

</mosaic_0001>

<llo_original>
// kernel: tpu_custom_call.1
$region0: #{tpu_custom_call.1}
  #allocation0 [shape = 'u32[]', space=smem, size = 0x4, offset = 0x4, fixed_abs, tag = 'smem constant byte address 0x4 - core index']
  #allocation1 [shape = 'u32[144,128]{1,0:T(1,128)}', space=vmem, size = 0x12000, scoped, tag = 'internal scratch']
  %s0 = inlined_call_operand.vmem [shape: f32[16,128], index: 0, kind: input, shape index: {}]
  %s1 = inlined_call_operand.vmem [shape: f32[64,16], index: 1, kind: input, shape index: {}]
  %s2 = inlined_call_operand.vmem [shape: f32[64,1], index: 2, kind: input, shape index: {}]
  %s3 = inlined_call_operand.vmem [shape: f32[2,64], index: 3, kind: input, shape index: {}]
  %s4 = inlined_call_operand.vmem [shape: f32[2], index: 4, kind: input, shape index: {}]
  %s5 = inlined_call_operand.hbm [shape: f32[2,128], index: 5, kind: output, shape index: {}]
  %s6 = sld [smem:[#allocation0]]
  $region34: #{tpu_custom_call.1} parent=0
    _
  %s8 = ssub.s32 1, %s6
  %s9 = scalar_select 0, %s8, %s6
  $region1: #{tpu_custom_call.1} parent=0
    #allocation2 [shape = 'u8[512]{0}', space=smem, size = 0x200, scoped, tag = 'input window, operand 4, single buffered']
    #allocation3 [shape = 's32[1]{0}', space=sflag, size = 0x4, scoped, tag = 'scoped memory for tpu_custom_call.1']
    #allocation4 [shape = 's32[1]{0}', space=sflag, size = 0x4, scoped, tag = 'scoped memory for tpu_custom_call.1']
    #allocation5 [shape = 'u8[1024]{0}', space=vmem, size = 0x400, scoped, tag = 'output window, operand 0, single buffered']
    %10 = vsyncpa [#allocation4], 0
    %11 = vsyncpa [#allocation3], 0
    // Predicated region
    $region2: #{tpu_custom_call.1} parent=1 // pred_check
      _
    $region3: #{tpu_custom_call.1} parent=1 // pred_check_branch
      %13 = sbr.rel (0) target = $region5
    $region4: #{tpu_custom_call.1} parent=1 // pred_region
      _
    $region5: #{tpu_custom_call.1} parent=1 // pred_fallthru
      _
    // Predicated region
    $region6: #{tpu_custom_call.1} parent=1 // pred_check
      _
    $region7: #{tpu_custom_call.1} parent=1 // pred_check_branch
      %15 = sbr.rel (0) target = $region9
    $region8: #{tpu_custom_call.1} parent=1 // pred_region
      _
    $region9: #{tpu_custom_call.1} parent=1 // pred_fallthru
      _
    // Predicated region
    $region10: #{tpu_custom_call.1} parent=1 // pred_check
      _
    $region11: #{tpu_custom_call.1} parent=1 // pred_check_branch
      %17 = sbr.rel (0) target = $region13
    $region12: #{tpu_custom_call.1} parent=1 // pred_region
      _
    $region13: #{tpu_custom_call.1} parent=1 // pred_fallthru
      _
    // Predicated region
    $region14: #{tpu_custom_call.1} parent=1 // pred_check
      _
    $region15: #{tpu_custom_call.1} parent=1 // pred_check_branch
      %19 = sbr.rel (0) target = $region17
    $region16: #{tpu_custom_call.1} parent=1 // pred_region
      _
    $region17: #{tpu_custom_call.1} parent=1 // pred_fallthru
      _
    // Predicated region
    $region18: #{tpu_custom_call.1} parent=1 // pred_check
      _
    $region19: #{tpu_custom_call.1} parent=1 // pred_check_branch
      %21 = sbr.rel (0) target = $region21
    $region20: #{tpu_custom_call.1} parent=1 // pred_region
      %s23 = ssub.s32 16, 16
      %24 = vsyncadd [#allocation4], %s23
      %s26 = sshll.u32 %s4, 4
      %s27 = int_to_ptr.vmem [resolvable:$true] %s26
      %29 = dma.vmem_to_smem %s27, 16, [#allocation2], [#allocation4]
    $region21: #{tpu_custom_call.1} parent=1 // pred_fallthru
      _
    // Predicated region
    $region22: #{tpu_custom_call.1} parent=1 // pred_check
      _
    $region23: #{tpu_custom_call.1} parent=1 // pred_check_branch
      %31 = sbr.rel (0) target = $region25
    $region24: #{tpu_custom_call.1} parent=1 // pred_region
      %32 = dma.done [#allocation4], 16
    $region25: #{tpu_custom_call.1} parent=1 // pred_fallthru
      _
    %33 = sfence
    %v34 = vld [vmem:[%s1] sm:$0xff]
    %v35 = vld [vmem:[%s1 + $0x8] sm:$0xff]
    %v36 = vld [vmem:[%s1 + $0x10] sm:$0xff]
    %v37 = vld [vmem:[%s1 + $0x18] sm:$0xff]
    %v38 = vld [vmem:[%s1 + $0x20] sm:$0xff]
    %v39 = vld [vmem:[%s1 + $0x28] sm:$0xff]
    %v40 = vld [vmem:[%s1 + $0x30] sm:$0xff]
    %v41 = vld [vmem:[%s1 + $0x38] sm:$0xff]
    %v42 = vld [vmem:[%s0] sm:$0xff]
    %v43 = vld [vmem:[%s0 + $0x8] sm:$0xff]
    %v44 = vld [vmem:[%s2] sm:$0xff]
    %v45 = vld [vmem:[%s2 + $0x8] sm:$0xff]
    %v46 = vld [vmem:[%s2 + $0x10] sm:$0xff]
    %v47 = vld [vmem:[%s2 + $0x18] sm:$0xff]
    %v48 = vld [vmem:[%s2 + $0x20] sm:$0xff]
    %v49 = vld [vmem:[%s2 + $0x28] sm:$0xff]
    %v50 = vld [vmem:[%s2 + $0x30] sm:$0xff]
    %v51 = vld [vmem:[%s2 + $0x38] sm:$0xff]
    %53 = vset.pattern.permute.xlu0 0
    %54 = vperm.xlu0 %53, %v44
    %v55 = vpop.permute.xlu0 %54
    %58 = vset.pattern.permute.xlu0 0
    %59 = vperm.xlu0 %58, %v45
    %v60 = vpop.permute.xlu0 %59
    %63 = vset.pattern.permute.xlu0 0
    %64 = vperm.xlu0 %63, %v46
    %v65 = vpop.permute.xlu0 %64
    %68 = vset.pattern.permute.xlu0 0
    %69 = vperm.xlu0 %68, %v47
    %v70 = vpop.permute.xlu0 %69
    %73 = vset.pattern.permute.xlu0 0
    %74 = vperm.xlu0 %73, %v48
    %v75 = vpop.permute.xlu0 %74
    %78 = vset.pattern.permute.xlu0 0
    %79 = vperm.xlu0 %78, %v49
    %v80 = vpop.permute.xlu0 %79
    %83 = vset.pattern.permute.xlu0 0
    %84 = vperm.xlu0 %83, %v50
    %v85 = vpop.permute.xlu0 %84
    %88 = vset.pattern.permute.xlu0 0
    %89 = vperm.xlu0 %88, %v51
    %v90 = vpop.permute.xlu0 %89
    %vm92 = vcmask 130048
    %v94 = vsel %vm92, %v34, 0
    %v97 = vsel %vm92, %v35, 0
    %v100 = vsel %vm92, %v36, 0
    %v103 = vsel %vm92, %v37, 0
    %v106 = vsel %vm92, %v38, 0
    %v109 = vsel %vm92, %v39, 0
    %v112 = vsel %vm92, %v40, 0
    %v115 = vsel %vm92, %v41, 0
    %117 = vmatprep.subr.mxu0 0.0
    %118 = vmatpush1.msra.mxu0 %v42
    %119 = vmatprep.subr.mxu0 0.0
    %120 = vmatpush1.msra.mxu0 %v43
    %121 = vmatprep.subr.mxu0 0.0
    %122 = vmatpush1.msra.mxu0 0.0
    %123 = vmatprep.subr.mxu0 0.0
    %124 = vmatpush1.msra.mxu0 0.0
    %125 = vmatprep.subr.mxu0 0.0
    %126 = vmatpush1.msra.mxu0 0.0
    %127 = vmatprep.subr.mxu0 0.0
    %128 = vmatpush1.msra.mxu0 0.0
    %129 = vmatprep.subr.mxu0 0.0
    %130 = vmatpush1.msra.mxu0 0.0
    %131 = vmatprep.subr.mxu0 0.0
    %132 = vmatpush1.msra.mxu0 0.0
    %133 = vmatprep.subr.mxu0 0.0
    %134 = vmatpush1.msra.mxu0 0.0
    %135 = vmatprep.subr.mxu0 0.0
    %136 = vmatpush1.msra.mxu0 0.0
    %137 = vmatprep.subr.mxu0 0.0
    %138 = vmatpush1.msra.mxu0 0.0
    %139 = vmatprep.subr.mxu0 0.0
    %140 = vmatpush1.msra.mxu0 0.0
    %141 = vmatprep.subr.mxu0 0.0
    %142 = vmatpush1.msra.mxu0 0.0
    %143 = vmatprep.subr.mxu0 0.0
    %144 = vmatpush1.msra.mxu0 0.0
    %145 = vmatprep.subr.mxu0 0.0
    %146 = vmatpush1.msra.mxu0 0.0
    %147 = vmatprep.subr.mxu0 0.0
    %148 = vmatpush1.msra.mxu0 0.0
    %149 = vmatprep.subr.mxu0 0.0
    %150 = vmatpush1.msra.mxu0 0.0
    %151 = vmatprep.subr.mxu0 0.0
    %152 = vmatpush1.msra.mxu0 0.0
    %153 = vmatprep.subr.mxu0 0.0
    %154 = vmatpush1.msra.mxu0 0.0
    %155 = vmatprep.subr.mxu0 0.0
    %156 = vmatpush1.msra.mxu0 0.0
    %157 = vmatprep.subr.mxu0 0.0
    %158 = vmatpush1.msra.mxu0 0.0
    %159 = vmatprep.subr.mxu0 0.0
    %160 = vmatpush1.msra.mxu0 0.0
    %161 = vmatprep.subr.mxu0 0.0
    %162 = vmatpush1.msra.mxu0 0.0
    %163 = vmatprep.subr.mxu0 0.0
    %164 = vmatpush1.msra.mxu0 0.0
    %165 = vmatprep.subr.mxu0 0.0
    %166 = vmatpush1.msra.mxu0 0.0
    %167 = vmatprep.subr.mxu0 0.0
    %168 = vmatpush1.msra.mxu0 0.0
    %169 = vmatprep.subr.mxu0 0.0
    %170 = vmatpush1.msra.mxu0 0.0
    %171 = vmatprep.subr.mxu0 0.0
    %172 = vmatpush1.msra.mxu0 0.0
    %173 = vmatprep.subr.mxu0 0.0
    %174 = vmatpush1.msra.mxu0 0.0
    %175 = vmatprep.subr.mxu0 0.0
    %176 = vmatpush1.msra.mxu0 0.0
    %177 = vmatprep.subr.mxu0 0.0
    %178 = vmatpush1.msra.mxu0 0.0
    %179 = vmatprep.subr.mxu0 0.0
    %180 = vmatpush1.msra.mxu0 0.0
    %181 = vmatprep.mubr.f32.mxu0 0.0
    %182 = vmatmul.mubr.f32.gmra.mrb[0].mxu0 %v94
    %v183 = vpop.f32.mrb[0].mxu0
    %v184 = vadd.f32 %v55, %v183
    %v185 = vpop.f32.mrb[0].mxu0
    %186 = vmatprep.mubr.f32.mxu0 0.0
    %187 = vmatmul.mubr.f32.gmra.mrb[0].mxu0 %v97
    %v188 = vpop.f32.mrb[0].mxu0
    %v189 = vadd.f32 %v60, %v188
    %v190 = vpop.f32.mrb[0].mxu0
    %191 = vmatprep.mubr.f32.mxu0 0.0
    %192 = vmatmul.mubr.f32.gmra.mrb[0].mxu0 %v100
    %v193 = vpop.f32.mrb[0].mxu0
    %v194 = vadd.f32 %v65, %v193
    %v195 = vpop.f32.mrb[0].mxu0
    %196 = vmatprep.mubr.f32.mxu0 0.0
    %197 = vmatmul.mubr.f32.gmra.mrb[0].mxu0 %v103
    %v198 = vpop.f32.mrb[0].mxu0
    %v199 = vadd.f32 %v70, %v198
    %v200 = vpop.f32.mrb[0].mxu0
    %201 = vmatprep.mubr.f32.mxu0 0.0
    %202 = vmatmul.mubr.f32.gmra.mrb[0].mxu0 %v106
    %v203 = vpop.f32.mrb[0].mxu0
    %v204 = vadd.f32 %v75, %v203
    %v205 = vpop.f32.mrb[0].mxu0
    %206 = vmatprep.mubr.f32.mxu0 0.0
    %207 = vmatmul.mubr.f32.gmra.mrb[0].mxu0 %v109
    %v208 = vpop.f32.mrb[0].mxu0
    %v209 = vadd.f32 %v80, %v208
    %v210 = vpop.f32.mrb[0].mxu0
    %211 = vmatprep.mubr.f32.mxu0 0.0
    %212 = vmatmul.mubr.f32.gmra.mrb[0].mxu0 %v112
    %v213 = vpop.f32.mrb[0].mxu0
    %v214 = vadd.f32 %v85, %v213
    %v215 = vpop.f32.mrb[0].mxu0
    %216 = vmatprep.mubr.f32.mxu0 0.0
    %217 = vmatmul.mubr.f32.gmra.mrb[0].mxu0 %v115
    %v218 = vpop.f32.mrb[0].mxu0
    %v219 = vadd.f32 %v90, %v218
    %v220 = vpop.f32.mrb[0].mxu0
    %221 = vdwg.mxu0
    %v222 = vmax.f32 %v184, 0.0
    %v223 = vmax.f32 %v189, 0.0
    %v224 = vmax.f32 %v194, 0.0
    %v225 = vmax.f32 %v199, 0.0
    %v226 = vmax.f32 %v204, 0.0
    %v227 = vmax.f32 %v209, 0.0
    %v228 = vmax.f32 %v214, 0.0
    %v229 = vmax.f32 %v219, 0.0
    %v230 = vld [vmem:[%s3] sm:$0x3]
    %vm231 = vcmask 523264
    %v233 = vsel %vm231, %v230, 0
    %235 = vmatprep.subr.mxu0 0.0
    %236 = vmatpush1.msra.mxu0 %v222
    %237 = vmatprep.subr.mxu0 0.0
    %238 = vmatpush1.msra.mxu0 %v223
    %239 = vmatprep.subr.mxu0 0.0
    %240 = vmatpush1.msra.mxu0 %v224
    %241 = vmatprep.subr.mxu0 0.0
    %242 = vmatpush1.msra.mxu0 %v225
    %243 = vmatprep.subr.mxu0 0.0
    %244 = vmatpush1.msra.mxu0 %v226
    %245 = vmatprep.subr.mxu0 0.0
    %246 = vmatpush1.msra.mxu0 %v227
    %247 = vmatprep.subr.mxu0 0.0
    %248 = vmatpush1.msra.mxu0 %v228
    %249 = vmatprep.subr.mxu0 0.0
    %250 = vmatpush1.msra.mxu0 %v229
    %251 = vmatprep.subr.mxu0 0.0
    %252 = vmatpush1.msra.mxu0 0.0
    %253 = vmatprep.subr.mxu0 0.0
    %254 = vmatpush1.msra.mxu0 0.0
    %255 = vmatprep.subr.mxu0 0.0
    %256 = vmatpush1.msra.mxu0 0.0
    %257 = vmatprep.subr.mxu0 0.0
    %258 = vmatpush1.msra.mxu0 0.0
    %259 = vmatprep.subr.mxu0 0.0
    %260 = vmatpush1.msra.mxu0 0.0
    %261 = vmatprep.subr.mxu0 0.0
    %262 = vmatpush1.msra.mxu0 0.0
    %263 = vmatprep.subr.mxu0 0.0
    %264 = vmatpush1.msra.mxu0 0.0
    %265 = vmatprep.subr.mxu0 0.0
    %266 = vmatpush1.msra.mxu0 0.0
    %267 = vmatprep.subr.mxu0 0.0
    %268 = vmatpush1.msra.mxu0 0.0
    %269 = vmatprep.subr.mxu0 0.0
    %270 = vmatpush1.msra.mxu0 0.0
    %271 = vmatprep.subr.mxu0 0.0
    %272 = vmatpush1.msra.mxu0 0.0
    %273 = vmatprep.subr.mxu0 0.0
    %274 = vmatpush1.msra.mxu0 0.0
    %275 = vmatprep.subr.mxu0 0.0
    %276 = vmatpush1.msra.mxu0 0.0
    %277 = vmatprep.subr.mxu0 0.0
    %278 = vmatpush1.msra.mxu0 0.0
    %279 = vmatprep.subr.mxu0 0.0
    %280 = vmatpush1.msra.mxu0 0.0
    %281 = vmatprep.subr.mxu0 0.0
    %282 = vmatpush1.msra.mxu0 0.0
    %283 = vmatprep.subr.mxu0 0.0
    %284 = vmatpush1.msra.mxu0 0.0
    %285 = vmatprep.subr.mxu0 0.0
    %286 = vmatpush1.msra.mxu0 0.0
    %287 = vmatprep.subr.mxu0 0.0
    %288 = vmatpush1.msra.mxu0 0.0
    %289 = vmatprep.subr.mxu0 0.0
    %290 = vmatpush1.msra.mxu0 0.0
    %291 = vmatprep.subr.mxu0 0.0
    %292 = vmatpush1.msra.mxu0 0.0
    %293 = vmatprep.subr.mxu0 0.0
    %294 = vmatpush1.msra.mxu0 0.0
    %295 = vmatprep.subr.mxu0 0.0
    %296 = vmatpush1.msra.mxu0 0.0
    %297 = vmatprep.subr.mxu0 0.0
    %298 = vmatpush1.msra.mxu0 0.0
    %299 = vmatprep.mubr.f32.mxu0 0.0
    %300 = vmatmul.mubr.f32.gmra.mrb[0].mxu0 %v233
    %v301 = vpop.f32.mrb[0].mxu0
    %v302 = vadd.f32 0.0, %v301
    %v303 = vpop.f32.mrb[0].mxu0
    %304 = vdwg.mxu0
    %s305 = sld [smem:[#allocation2]]
    %v306 = vstv %s305
    %v307 = vadd.f32 %v302, %v306
    %s308 = sld [smem:[#allocation2 + $0x1]]
    %v309 = vstv %s308
    %v310 = vadd.f32 %v302, %v309
    %v311 = vmax.f32 %v310, 0.0
    %vm312 = vcmp.ne.f32.partialorder %v310, %v310
    %v313 = vadd.f32 %v310, 0.0
    %v314 = vand.u32 2147483647, %v310
    %v315 = vsub.f32 0.0, %v314
    %v316 = vmul.f32 %v315, 1.442695
    %v317 = vpow.pop %v316
    %v318 = vadd.f32 %v317, 1.0
    %v319 = vlog2.pop %v318
    %v320 = vmul.f32 %v319, 0.6931472
    %v321 = vmul.f32 -0.5, %v317
    %v322 = vadd.f32 %v321, 1.0
    %v323 = vmul.f32 %v322, %v317
    %v324 = vand.u32 2147483647, %v317
    %vm325 = vcmp.lt.f32.partialorder %v324, 0.0004427343
    %v326 = vsel %vm325, %v323, %v320
    %v327 = vadd.f32 %v311, %v326
    %v328 = vsel %vm312, %v313, %v327
    %v329 = vadd.f32 %v328, 1e-06
    %vm330 = vcmask 1040384
    %v331 = vsel %vm330, %v307, %v329
    %332 = vst [vmem:[#allocation5] sm:$0x3] %v331
    // Predicated region
    $region26: #{tpu_custom_call.1} parent=1 // pred_check
      _
    $region27: #{tpu_custom_call.1} parent=1 // pred_check_branch
      %334 = sbr.rel (0) target = $region29
    $region28: #{tpu_custom_call.1} parent=1 // pred_region
      %s336 = ssub.s32 32, 32
      %337 = vsyncadd [#allocation3], %s336
      %s339 = sshll.u32 [#allocation5], 4
      %s340 = int_to_ptr.vmem [resolvable:$true] %s339
      %342 = dma.vmem_to_hbm [thread:$0]  %s340, 32, %s5, [#allocation3]
    $region29: #{tpu_custom_call.1} parent=1 // pred_fallthru
      _
    // Predicated region
    $region30: #{tpu_custom_call.1} parent=1 // pred_check
      _
    $region31: #{tpu_custom_call.1} parent=1 // pred_check_branch
      %344 = sbr.rel (0) target = $region33
    $region32: #{tpu_custom_call.1} parent=1 // pred_region
      %345 = dma.done [#allocation3], 32
    $region33: #{tpu_custom_call.1} parent=1 // pred_fallthru
      _
    %346 = vsyncpa [#allocation3], 1
    %347 = vsyncpa [#allocation4], 1

</llo_original>
